<compile_context>
chip_gen: v5e
topology: v5e:2x2
jax: 0.10.0
libtpu: 0.0.40
codegen_flags: <defaults>
</compile_context>

<pallas_src>
import functools

import jax
import jax.numpy as jnp
from jax.experimental import pallas as pl
from jax.experimental.pallas import tpu as pltpu


def _round_up(x, m):
    return -(-x // m) * m


def _vmem_budget_and_limit():
    """Per-generation scoped-VMEM limit and a padded per-step tile budget."""
    try:
        phys = int(pltpu.get_tpu_info().vmem_capacity_bytes)
    except Exception:
        phys = 64 << 20                       # conservative (v7x per-TC VMEM)
    limit = min((phys * 3) // 4, 96 << 20)     # 96 MiB on v5e/v6e, 48 MiB on v7x
    budget = limit // 3                        # headroom for compiler scratch etc.
    return budget, limit


def _choose_tile_hw(hw, c, preds_itemsize, n_batch, budget_bytes):
    """Largest lane tile whose *padded*, double-buffered VMEM footprint fits
    `budget_bytes`, with >= 2 total grid steps when possible (v7x megacore)."""
    # f32 packs 1 value/sublane (pad C to 8 rows); bf16 packs 2 (pad to 16); ...
    pack = max(1, 4 // preds_itemsize)
    preds_rows = _round_up(c, 8 * pack)
    # int32 labels block (1, T) pads to 8 sublanes.
    bytes_per_lane = preds_rows * preds_itemsize + 8 * 4
    in_flight_per_lane = 2 * bytes_per_lane            # double buffered
    cap = max(128, (budget_bytes // in_flight_per_lane) // 128 * 128)
    tile = min(cap, _round_up(hw, 128))
    # Guarantee >= 2 grid steps so both v7x TensorCores get work.
    while n_batch * (-(-hw // tile)) < 2 and tile > 128:
        tile = max(128, _round_up(tile // 2, 128))
    return tile


def _focal_kernel(*refs, gamma, use_alpha, hw, tile_hw, mask_tail):
    if use_alpha:
        preds_ref, labels_ref, alpha_ref, out_ref = refs
    else:
        preds_ref, labels_ref, out_ref = refs
        alpha_ref = None

    x = preds_ref[...].astype(jnp.float32)                    # (C, T)
    lab = labels_ref[...]                                      # (1, T) int32

    # Numerically-stable log-softmax pieces over the class (sublane) axis.
    # The full log-softmax matrix is never materialized.
    m = jnp.max(x, axis=0, keepdims=True)                      # (1, T)
    shifted = x - m                                             # (C, T)
    e = jnp.exp(shifted)                                        # (C, T)
    sumexp = jnp.sum(e, axis=0, keepdims=True)                  # (1, T)

    # One-hot gather over the class axis (XLU cross-sublane reductions; no MXU).
    cls = jax.lax.broadcasted_iota(jnp.int32, x.shape, 0)       # (C, T)
    onehot = (cls == lab).astype(jnp.float32)                   # (C, T)

    g = jnp.sum(shifted * onehot, axis=0, keepdims=True)        # shifted[label]
    logpt = g - jnp.log(sumexp)                                  # (1, T)
    # Reuse exp(shifted) for pt; exact divide keeps 1e-5 tolerance vs. torch.
    pt = jnp.sum(e * onehot, axis=0, keepdims=True) / sumexp     # (1, T)

    if use_alpha:
        at = jnp.sum(alpha_ref[...] * onehot, axis=0, keepdims=True)
        logpt = logpt * at

    one_minus_pt = 1.0 - pt
    if gamma == 0.0:
        focal = jnp.ones_like(one_minus_pt)
    elif gamma == 1.0:
        focal = one_minus_pt
    elif gamma == 2.0:
        focal = one_minus_pt * one_minus_pt
    else:
        focal = jnp.power(one_minus_pt, gamma)
    loss = -focal * logpt                                        # (1, T)

    if mask_tail:
        # ceil-div grid: zero out lanes past the true HW extent of this block.
        lane = jax.lax.broadcasted_iota(jnp.int32, loss.shape, 1)
        valid = (pl.program_id(1) * tile_hw + lane) < hw
        loss = jnp.where(valid, loss, jnp.float32(0.0))

    # Per-block partial sum at [0, 0] of a lane-aligned (8, 128) VMEM tile.
    # (A (1,1) SMEM scalar output would be marginally smaller, but this path is
    #  proven to lower and its cost is negligible vs. the MiB-scale data read.)
    s = jnp.sum(loss)
    r = jax.lax.broadcasted_iota(jnp.int32, (8, 128), 0)
    c = jax.lax.broadcasted_iota(jnp.int32, (8, 128), 1)
    out_ref[...] = jnp.where((r == 0) & (c == 0), s, jnp.float32(0.0))


def focal_loss(preds_nchw, labels_nhw, *, gamma=0.0, alpha=None,
               size_average=True):
    """preds_nchw: (N, C, H, W) float (f32 or bf16); labels_nhw: (N, H, W) int."""
    N, C, H, W = preds_nchw.shape
    HW = H * W
    M = N * HW

    # Free, contiguous reshapes (no transpose / extra HBM pass).
    preds3d = preds_nchw.reshape(N, C, HW)
    labels3d = labels_nhw.reshape(N, 1, HW).astype(jnp.int32)

    budget, vmem_limit = _vmem_budget_and_limit()
    tile_hw = _choose_tile_hw(HW, C, preds3d.dtype.itemsize, N, budget)
    n_hw = -(-HW // tile_hw)
    mask_tail = (HW % tile_hw) != 0

    use_alpha = alpha is not None
    operands = [preds3d, labels3d]
    in_specs = [
        pl.BlockSpec((None, C, tile_hw), lambda n, j: (n, 0, j)),
        pl.BlockSpec((None, 1, tile_hw), lambda n, j: (n, 0, j)),
    ]
    if use_alpha:
        if isinstance(alpha, (float, int)):
            alpha_arr = jnp.asarray([alpha, 1.0 - alpha], dtype=jnp.float32)
        else:
            alpha_arr = jnp.asarray(alpha, dtype=jnp.float32)
        assert alpha_arr.shape[0] == C, "alpha must have one weight per class"
        operands.append(alpha_arr.reshape(C, 1))
        # resident across the whole grid (constant index_map)
        in_specs.append(pl.BlockSpec((C, 1), lambda n, j: (0, 0)))

    kernel = functools.partial(
        _focal_kernel, gamma=float(gamma), use_alpha=use_alpha,
        hw=HW, tile_hw=tile_hw, mask_tail=mask_tail)

    partials = pl.pallas_call(
        kernel,
        out_shape=jax.ShapeDtypeStruct((N, n_hw, 8, 128), jnp.float32),
        grid_spec=pltpu.PrefetchScalarGridSpec(
            num_scalar_prefetch=0,
            grid=(N, n_hw),
            in_specs=in_specs,
            out_specs=pl.BlockSpec((None, None, 8, 128),
                                   lambda n, j: (n, j, 0, 0)),
        ),
        compiler_params=pltpu.CompilerParams(
            dimension_semantics=("parallel", "parallel"),
            vmem_limit_bytes=int(vmem_limit)),
    )(*operands)

    total = jnp.sum(partials)          # tree-reduced in JAX (stable for big M)
    if size_average:
        total = total / jnp.float32(M)
    return total


def _focal_loss_ref(preds_nchw, labels_nhw, *, gamma, alpha, size_average):
    """Pure-JAX reference mirroring the PyTorch module."""
    N, C, H, W = preds_nchw.shape
    preds = jnp.transpose(preds_nchw, (0, 2, 3, 1)).reshape(-1, C)
    labels = labels_nhw.reshape(-1)
    logsm = jax.nn.log_softmax(preds.astype(jnp.float32), axis=1)
    logpt = jnp.take_along_axis(logsm, labels[:, None], axis=1)[:, 0]
    pt = jnp.exp(logpt)
    if alpha is not None:
        if isinstance(alpha, (float, int)):
            a = jnp.asarray([alpha, 1.0 - alpha], jnp.float32)
        else:
            a = jnp.asarray(alpha, jnp.float32)
        logpt = logpt * a[labels]
    loss = -1.0 * (1.0 - pt) ** gamma * logpt
    return jnp.mean(loss) if size_average else jnp.sum(loss)


if __name__ == "__main__":
    key = jax.random.PRNGKey(0)
    k1, k2 = jax.random.split(key)

    N, C, H, W = 2, 4, 16, 16
    preds = jax.random.normal(k1, (N, C, H, W), dtype=jnp.float32)
    labels = jax.random.randint(k2, (N, H, W), 0, C, dtype=jnp.int32)

    gamma = 2.0
    alpha = [0.1, 0.2, 0.3, 0.4]   # per-class balance weights (length C)

    # mean reduction with alpha
    out = focal_loss(preds, labels, gamma=gamma, alpha=alpha,
                     size_average=True)
    out = jax.block_until_ready(out)
    ref = _focal_loss_ref(preds, labels, gamma=gamma, alpha=alpha,
                          size_average=True)
    assert jnp.allclose(out, ref, rtol=1e-5, atol=1e-6), (out, ref)

    # sum reduction, no alpha (exercises the alpha-free operand path)
    out2 = focal_loss(preds, labels, gamma=gamma, alpha=None,
                      size_average=False)
    out2 = jax.block_until_ready(out2)
    ref2 = _focal_loss_ref(preds, labels, gamma=gamma, alpha=None,
                           size_average=False)
    assert jnp.allclose(out2, ref2, rtol=1e-5, atol=1e-5), (out2, ref2)

    print("KERNEL_OK")
</pallas_src>

<mosaic_0001>
module attributes {stable_mosaic.version = 11 : i64} {
  func.func @_focal_kernel(%arg0: i32, %arg1: i32, %arg2: memref<1x4x256xf32, #tpu.memory_space<vmem>>, %arg3: memref<1x1x256xi32, #tpu.memory_space<vmem>>, %arg4: memref<4x1xf32, #tpu.memory_space<vmem>>, %arg5: memref<1x1x8x128xf32, #tpu.memory_space<vmem>>) attributes {dimension_semantics = [#tpu.dimension_semantics<parallel>, #tpu.dimension_semantics<parallel>], iteration_bounds = array<i64: 2, 1>, scalar_prefetch = 0 : i64, scratch_operands = 0 : i64, tpu.core_type = #tpu.core_type<tc>, window_params = [{transform_indices = @transform_0, window_bounds = array<i64: 1, 4, 256>}, {transform_indices = @transform_1, window_bounds = array<i64: 1, 1, 256>}, {pipeline_mode = #tpu.pipeline_mode<synchronous>, transform_indices = @transform_2, window_bounds = array<i64: 4, 1>}, {transform_indices = @transform_3, window_bounds = array<i64: 1, 1, 8, 128>}]} {
    %c0 = arith.constant 0 : index
    %c0_0 = arith.constant 0 : index
    %c0_1 = arith.constant 0 : index
    %0 = vector.load %arg2[%c0, %c0_0, %c0_1] : memref<1x4x256xf32, #tpu.memory_space<vmem>>, vector<1x4x256xf32>
    %1 = vector.shape_cast %0 : vector<1x4x256xf32> to vector<4x256xf32>
    %c0_2 = arith.constant 0 : index
    %c0_3 = arith.constant 0 : index
    %c0_4 = arith.constant 0 : index
    %2 = vector.load %arg3[%c0_2, %c0_3, %c0_4] : memref<1x1x256xi32, #tpu.memory_space<vmem>>, vector<1x1x256xi32>
    %3 = vector.shape_cast %2 : vector<1x1x256xi32> to vector<1x256xi32>
    %cst = arith.constant dense<0xFF800000> : vector<256xf32>
    %4 = vector.multi_reduction <maximumf>, %1, %cst [0] : vector<4x256xf32> to vector<256xf32>
    %5 = vector.shape_cast %4 : vector<256xf32> to vector<1x256xf32>
    %6 = vector.broadcast %5 : vector<1x256xf32> to vector<4x256xf32>
    %7 = arith.subf %1, %6 : vector<4x256xf32>
    %8 = math.exp %7 : vector<4x256xf32>
    %cst_5 = arith.constant dense<0.000000e+00> : vector<256xf32>
    %9 = vector.multi_reduction <add>, %8, %cst_5 [0] : vector<4x256xf32> to vector<256xf32>
    %10 = vector.shape_cast %9 : vector<256xf32> to vector<1x256xf32>
    %11 = tpu.iota {dimensions = array<i32: 0>} : vector<4x256xi32>
    %12 = vector.broadcast %3 : vector<1x256xi32> to vector<4x256xi32>
    %13 = arith.cmpi eq, %11, %12 : vector<4x256xi32>
    %14 = arith.extui %13 : vector<4x256xi1> to vector<4x256xi32>
    %15 = arith.sitofp %14 : vector<4x256xi32> to vector<4x256xf32>
    %16 = arith.mulf %7, %15 : vector<4x256xf32>
    %cst_6 = arith.constant dense<0.000000e+00> : vector<256xf32>
    %17 = vector.multi_reduction <add>, %16, %cst_6 [0] : vector<4x256xf32> to vector<256xf32>
    %18 = vector.shape_cast %17 : vector<256xf32> to vector<1x256xf32>
    %19 = math.log %10 : vector<1x256xf32>
    %20 = arith.subf %18, %19 : vector<1x256xf32>
    %21 = arith.mulf %8, %15 : vector<4x256xf32>
    %cst_7 = arith.constant dense<0.000000e+00> : vector<256xf32>
    %22 = vector.multi_reduction <add>, %21, %cst_7 [0] : vector<4x256xf32> to vector<256xf32>
    %23 = vector.shape_cast %22 : vector<256xf32> to vector<1x256xf32>
    %24 = arith.divf %23, %10 : vector<1x256xf32>
    %c0_8 = arith.constant 0 : index
    %c0_9 = arith.constant 0 : index
    %25 = vector.load %arg4[%c0_8, %c0_9] : memref<4x1xf32, #tpu.memory_space<vmem>>, vector<4x1xf32>
    %26 = vector.broadcast %25 : vector<4x1xf32> to vector<4x256xf32>
    %27 = arith.mulf %26, %15 : vector<4x256xf32>
    %cst_10 = arith.constant dense<0.000000e+00> : vector<256xf32>
    %28 = vector.multi_reduction <add>, %27, %cst_10 [0] : vector<4x256xf32> to vector<256xf32>
    %29 = vector.shape_cast %28 : vector<256xf32> to vector<1x256xf32>
    %30 = arith.mulf %20, %29 : vector<1x256xf32>
    %cst_11 = arith.constant 1.000000e+00 : f32
    %31 = vector.broadcast %cst_11 : f32 to vector<1x256xf32>
    %32 = arith.subf %31, %24 : vector<1x256xf32>
    %33 = arith.mulf %32, %32 : vector<1x256xf32>
    %cst_12 = arith.constant 0.000000e+00 : f32
    %34 = vector.broadcast %cst_12 : f32 to vector<1x256xf32>
    %35 = arith.subf %34, %33 : vector<1x256xf32>
    %36 = arith.mulf %35, %30 : vector<1x256xf32>
    %37 = vector.shape_cast %36 : vector<1x256xf32> to vector<1x1x256xf32>
    %cst_13 = arith.constant dense<0.000000e+00> : vector<1xf32>
    %38 = vector.multi_reduction <add>, %37, %cst_13 [1, 2] : vector<1x1x256xf32> to vector<1xf32>
    %39 = vector.shape_cast %38 : vector<1xf32> to vector<1x1x1xf32>
    %40 = vector.extract %39[0, 0, 0] : f32 from vector<1x1x1xf32>
    %41 = tpu.iota {dimensions = array<i32: 0>} : vector<8x128xi32>
    %42 = tpu.iota {dimensions = array<i32: 1>} : vector<8x128xi32>
    %c0_i32 = arith.constant 0 : i32
    %43 = vector.broadcast %c0_i32 : i32 to vector<8x128xi32>
    %44 = arith.cmpi eq, %41, %43 : vector<8x128xi32>
    %c0_i32_14 = arith.constant 0 : i32
    %45 = vector.broadcast %c0_i32_14 : i32 to vector<8x128xi32>
    %46 = arith.cmpi eq, %42, %45 : vector<8x128xi32>
    %47 = arith.andi %44, %46 : vector<8x128xi1>
    %cst_15 = arith.constant 0.000000e+00 : f32
    %48 = vector.broadcast %40 : f32 to vector<8x128xf32>
    %49 = vector.broadcast %cst_15 : f32 to vector<8x128xf32>
    %50 = arith.select %47, %48, %49 : vector<8x128xi1>, vector<8x128xf32>
    %c0_16 = arith.constant 0 : index
    %c0_17 = arith.constant 0 : index
    %c0_18 = arith.constant 0 : index
    %c0_19 = arith.constant 0 : index
    %51 = vector.load %arg5[%c0_16, %c0_17, %c0_18, %c0_19] : memref<1x1x8x128xf32, #tpu.memory_space<vmem>>, vector<1x1x8x128xf32>
    %52 = vector.shape_cast %51 : vector<1x1x8x128xf32> to vector<8x128xf32>
    %53 = vector.shape_cast %50 : vector<8x128xf32> to vector<1x1x8x128xf32>
    tpu.vector_store %arg5[%c0_16, %c0_17, %c0_18, %c0_19], %53 {strides = array<i32>} : memref<1x1x8x128xf32, #tpu.memory_space<vmem>>, vector<1x1x8x128xf32>,
    return
  }
  func.func @transform_0(%arg0: i32, %arg1: i32) -> (i32, i32, i32) {
    %c0_i32 = arith.constant 0 : i32
    %c0_i32_0 = arith.constant 0 : i32
    return %arg0, %c0_i32, %arg1 : i32, i32, i32
  }
  func.func @transform_1(%arg0: i32, %arg1: i32) -> (i32, i32, i32) {
    %c0_i32 = arith.constant 0 : i32
    %c0_i32_0 = arith.constant 0 : i32
    return %arg0, %c0_i32, %arg1 : i32, i32, i32
  }
  func.func @transform_2(%arg0: i32, %arg1: i32) -> (i32, i32) {
    %c0_i32 = arith.constant 0 : i32
    %c0_i32_0 = arith.constant 0 : i32
    %c0_i32_1 = arith.constant 0 : i32
    return %c0_i32, %c0_i32_0 : i32, i32
  }
  func.func @transform_3(%arg0: i32, %arg1: i32) -> (i32, i32, i32, i32) {
    %c0_i32 = arith.constant 0 : i32
    %c0_i32_0 = arith.constant 0 : i32
    %c0_i32_1 = arith.constant 0 : i32
    return %arg0, %arg1, %c0_i32, %c0_i32_0 : i32, i32, i32, i32
  }
}

</mosaic_0001>

<llo_original>
// kernel: tpu_custom_call.1
$region0: #{tpu_custom_call.1}
  #allocation0 [shape = 'u32[]', space=smem, size = 0x4, offset = 0x4, fixed_abs, tag = 'smem constant byte address 0x4 - core index']
  #allocation1 [shape = 'u32[72,128]{1,0:T(1,128)}', space=vmem, size = 0x9000, scoped, tag = 'internal scratch']
  %s0 = inlined_call_operand.hbm [shape: f32[2,4,256], index: 0, kind: input, shape index: {}]
  %s1 = inlined_call_operand.vmem [shape: s32[2,1,256], index: 1, kind: input, shape index: {}]
  %s2 = inlined_call_operand.vmem [shape: f32[4,1], index: 2, kind: input, shape index: {}]
  %s3 = inlined_call_operand.hbm [shape: f32[2,1,8,128], index: 3, kind: output, shape index: {}]
  %s4 = sld [smem:[#allocation0]]
  $region49: #{tpu_custom_call.1} parent=0
    _
  %s6 = ssub.s32 1, %s4
  %s7 = scalar_select 0, %s6, %s4
  $region1: #{tpu_custom_call.1} parent=0
    #allocation2 [shape = 'u8[8192]{0}', space=vmem, size = 0x2000, scoped, tag = 'input window, operand 0']
    #allocation3 [shape = 's32[2]{0}', space=sflag, size = 0x8, scoped, tag = 'scoped memory for tpu_custom_call.1']
    #allocation4 [shape = 's32[2]{0}', space=sflag, size = 0x8, scoped, tag = 'scoped memory for tpu_custom_call.1']
    #allocation5 [shape = 'u8[8192]{0}', space=vmem, size = 0x2000, scoped, tag = 'output window, operand 0']
    %8 = vsyncpa [#allocation3], 0
    %s9 = scalar_lea.sflag [#allocation3], 1
    %10 = vsyncpa %s9, 0
    %11 = vsyncpa [#allocation4], 0
    %s12 = scalar_lea.sflag [#allocation4], 1
    %13 = vsyncpa %s12, 0
    loop: start=0, step=1, limit=4
    $region2: #{tpu_custom_call.1} parent=1 // loop_pre_header
      _
    $region3: #{tpu_custom_call.1} parent=1 // loop_header
      %s15 = sphi 0, %s19
      %p16 = scmp.ge.s32.totalorder %s15, 4
      %s22 = sphi 0, %s34
      %s23 = sphi 0, %s30
      %s24 = sphi 0, %s22
      %s25 = sphi 0, %s23
      %s26 = sphi 0, %s24
      %s27 = sphi 0, %s25
      %s39 = sphi 0, %s41
      %s42 = sphi 0, %s39
      %s43 = sphi 0, %s42
      %s59 = sphi 0, %s43
      %s67 = sphi 0, %s69
      %s70 = sphi 0, %s67
      %s71 = sphi 0, %s70
      %s87 = sphi 0, %s71
      %s91 = sphi 0, %s91
      %s93 = sphi 0, %s91
      %s94 = sphi 0, %s93
      %s108 = sphi 0, %s94
      %s116 = sphi 0, %s118
      %s119 = sphi 0, %s116
      %s120 = sphi 0, %s119
      %s136 = sphi 0, %s120
    $region4: #{tpu_custom_call.1} parent=1 // loop_header_branch
      %18 = sbr.rel (%p16) target = $region8
    $region5: #{tpu_custom_call.1} parent=1 // loop_body
      %s20 = ssub.s32 %s15, 1
      %s21 = ssub.s32 %s15, 2
      %s28 = sadd.s32 1, %s23
      %p29 = scmp.ge.s32.totalorder %s28, 1
      %s30 = scalar_select %p29, 0, %s28
      %s31 = sadd.s32 1, %s22
      %s32 = scalar_select %p29, %s31, %s22
      %p33 = scmp.ge.s32.totalorder %s32, 2
      %s34 = scalar_select %p33, 0, %s32
      %s35 = ssub.s32 %s22, %s34
      %s36 = ssub.s32 %s23, %s30
      %s37 = sor.u32 %s35, %s36
      %p38 = scmp.eq.s32.totalorder %s37, 0
      %s40 = sadd.s32 %s39, 1
      %s41 = scalar_select %p38, %s39, %s40
      %p44 = pneg %p38
      %p45 = scmp.eq.s32.totalorder %s15, 1
      %p46 = por %p44, %p45
      %p47 = scmp.ne.s32.totalorder %s39, %s42
      %p48 = scmp.eq.s32.totalorder %s15, 0
      %p49 = por %p47, %p48
      %p50 = scmp.ne.s32.totalorder %s39, %s42
      %p51 = scmp.eq.s32.totalorder %s20, 1
      %p52 = por %p50, %p51
      %p53 = scmp.ne.s32.totalorder %s42, %s43
      %p54 = scmp.eq.s32.totalorder %s20, 0
      %p55 = por %p53, %p54
      %p56 = scmp.ne.s32.totalorder %s42, %s43
      %p57 = scmp.eq.s32.totalorder %s21, 1
      %p58 = por %p56, %p57
      %p60 = scmp.ne.s32.totalorder %s43, %s59
      %p61 = scmp.eq.s32.totalorder %s21, 0
      %p62 = por %p60, %p61
      %s63 = ssub.s32 %s22, %s34
      %s64 = ssub.s32 %s23, %s30
      %s65 = sor.u32 %s63, %s64
      %p66 = scmp.eq.s32.totalorder %s65, 0
      %s68 = sadd.s32 %s67, 1
      %s69 = scalar_select %p66, %s67, %s68
      %p72 = pneg %p66
      %p73 = scmp.eq.s32.totalorder %s15, 1
      %p74 = por %p72, %p73
      %p75 = scmp.ne.s32.totalorder %s67, %s70
      %p76 = scmp.eq.s32.totalorder %s15, 0
      %p77 = por %p75, %p76
      %p78 = scmp.ne.s32.totalorder %s67, %s70
      %p79 = scmp.eq.s32.totalorder %s20, 1
      %p80 = por %p78, %p79
      %p81 = scmp.ne.s32.totalorder %s70, %s71
      %p82 = scmp.eq.s32.totalorder %s20, 0
      %p83 = por %p81, %p82
      %p84 = scmp.ne.s32.totalorder %s70, %s71
      %p85 = scmp.eq.s32.totalorder %s21, 1
      %p86 = por %p84, %p85
      %p88 = scmp.ne.s32.totalorder %s71, %s87
      %p89 = scmp.eq.s32.totalorder %s21, 0
      %p90 = por %p88, %p89
      %s92 = sadd.s32 %s91, 1
      %p95 = scmp.eq.s32.totalorder %s15, 1
      %p96 = scmp.ne.s32.totalorder %s91, %s93
      %p97 = scmp.eq.s32.totalorder %s15, 0
      %p98 = por %p96, %p97
      %p99 = scmp.ne.s32.totalorder %s91, %s93
      %p100 = scmp.eq.s32.totalorder %s20, 1
      %p101 = por %p99, %p100
      %p102 = scmp.ne.s32.totalorder %s93, %s94
      %p103 = scmp.eq.s32.totalorder %s20, 0
      %p104 = por %p102, %p103
      %p105 = scmp.ne.s32.totalorder %s93, %s94
      %p106 = scmp.eq.s32.totalorder %s21, 1
      %p107 = por %p105, %p106
      %p109 = scmp.ne.s32.totalorder %s94, %s108
      %p110 = scmp.eq.s32.totalorder %s21, 0
      %p111 = por %p109, %p110
      %s112 = ssub.s32 %s22, %s34
      %s113 = ssub.s32 %s23, %s30
      %s114 = sor.u32 %s112, %s113
      %p115 = scmp.eq.s32.totalorder %s114, 0
      %s117 = sadd.s32 %s116, 1
      %s118 = scalar_select %p115, %s116, %s117
      %p121 = pneg %p115
      %p122 = scmp.eq.s32.totalorder %s15, 1
      %p123 = por %p121, %p122
      %p124 = scmp.ne.s32.totalorder %s116, %s119
      %p125 = scmp.eq.s32.totalorder %s15, 0
      %p126 = por %p124, %p125
      %p127 = scmp.ne.s32.totalorder %s116, %s119
      %p128 = scmp.eq.s32.totalorder %s20, 1
      %p129 = por %p127, %p128
      %p130 = scmp.ne.s32.totalorder %s119, %s120
      %p131 = scmp.eq.s32.totalorder %s20, 0
      %p132 = por %p130, %p131
      %p133 = scmp.ne.s32.totalorder %s119, %s120
      %p134 = scmp.eq.s32.totalorder %s21, 1
      %p135 = por %p133, %p134
      %p137 = scmp.ne.s32.totalorder %s120, %s136
      %p138 = scmp.eq.s32.totalorder %s21, 0
      %p139 = por %p137, %p138
      %p140 = scmp.le.s32.totalorder 1, %s15
      %p141 = scmp.lt.s32.totalorder %s15, 3
      %p142 = pnand %p140, %p141
      %p143 = pneg %p142
      // Predicated region
      $region9: #{tpu_custom_call.1} parent=5 // pred_check
        _
      $region10: #{tpu_custom_call.1} parent=5 // pred_check_branch
        %145 = sbr.rel (%p142) target = $region12
      $region11: #{tpu_custom_call.1} parent=5 // pred_region
        %s146 = ssub.s32 %s15, 1
        // Predicated region
        $region13: #{tpu_custom_call.1} parent=11 // pred_check
          %p147 = pneg %p104
        $region14: #{tpu_custom_call.1} parent=11 // pred_check_branch
          %149 = sbr.rel (%p147) target = $region16
        $region15: #{tpu_custom_call.1} parent=11 // pred_region
          _
        $region16: #{tpu_custom_call.1} parent=11 // pred_fallthru
          _
      $region12: #{tpu_custom_call.1} parent=5 // pred_fallthru
        _
      %p150 = scmp.lt.s32.totalorder %s15, 2
      // Predicated region
      $region17: #{tpu_custom_call.1} parent=5 // pred_check
        %p151 = pneg %p150
      $region18: #{tpu_custom_call.1} parent=5 // pred_check_branch
        %153 = sbr.rel (%p151) target = $region20
      $region19: #{tpu_custom_call.1} parent=5 // pred_region
        // Predicated region
        $region21: #{tpu_custom_call.1} parent=19 // pred_check
          %p154 = pneg %p49
        $region22: #{tpu_custom_call.1} parent=19 // pred_check_branch
          %156 = sbr.rel (%p154) target = $region24
        $region23: #{tpu_custom_call.1} parent=19 // pred_region
          %s157 = sand.u32 %s39, 1
          %s158 = scalar_lea.sflag [#allocation3], %s157
          %s159 = sand.u32 %s39, 1
          %s160 = smul.addr %s159, 8
          %s161 = scalar_lea.vmem [#allocation2], %s160
          %s162 = smul.u32 2, %s23
          %164 = vsyncadd %s158, 0
          %s165 = smul.addr %s22, 2
          %s166 = sadd.s32 %s162, %s165
          %s167 = smul.addr %s166, 4
          %s168 = scalar_lea.hbm %s0, %s167
          %s170 = sshll.u32 %s168, 4
          %s171 = int_to_ptr.hbm [resolvable:$true] %s170
          %s172 = sshll.u32 %s161, 4
          %s173 = int_to_ptr.vmem [resolvable:$true] %s172
          %175 = dma.hbm_to_vmem [thread:$0]  %s171, 128, %s173, %s158
        $region24: #{tpu_custom_call.1} parent=19 // pred_fallthru
          _
        // Predicated region
        $region25: #{tpu_custom_call.1} parent=19 // pred_check
          %p176 = pneg %p77
        $region26: #{tpu_custom_call.1} parent=19 // pred_check_branch
          %178 = sbr.rel (%p176) target = $region28
        $region27: #{tpu_custom_call.1} parent=19 // pred_region
          %s179 = smul.u32 2, %s23
          %p180 = scmp.lt.s32.totalorder %s22, 1
          %s181 = scalar_select %p180, %s22, 1
          %p182 = scmp.lt.s32.totalorder %s179, 1
          %s183 = scalar_select %p182, %s179, 1
          %s184 = smul.addr %s181, 2
          %s185 = sadd.s32 %s183, %s184
          %s186 = scalar_lea.vmem %s1, %s185
          %s187 = smul.u32 2, %s23
        $region28: #{tpu_custom_call.1} parent=19 // pred_fallthru
          _
      $region20: #{tpu_custom_call.1} parent=5 // pred_fallthru
        _
      %p188 = scmp.le.s32.totalorder 1, %s15
      %p189 = scmp.lt.s32.totalorder %s15, 3
      %p190 = pnand %p188, %p189
      %p191 = pneg %p190
      // Predicated region
      $region29: #{tpu_custom_call.1} parent=5 // pred_check
        _
      $region30: #{tpu_custom_call.1} parent=5 // pred_check_branch
        %193 = sbr.rel (%p190) target = $region32
      $region31: #{tpu_custom_call.1} parent=5 // pred_region
        %s194 = ssub.s32 %s15, 1
        %s195 = sand.u32 %s42, 1
        %s196 = scalar_lea.sflag [#allocation3], %s195
        %s197 = sand.u32 %s42, 1
        %s198 = smul.addr %s197, 8
        %s199 = scalar_lea.vmem [#allocation2], %s198
        // Predicated region
        $region33: #{tpu_custom_call.1} parent=31 // pred_check
          %p200 = pneg %p55
        $region34: #{tpu_custom_call.1} parent=31 // pred_check_branch
          %202 = sbr.rel (%p200) target = $region36
        $region35: #{tpu_custom_call.1} parent=31 // pred_region
          %204 = dma.done %s196, 128
        $region36: #{tpu_custom_call.1} parent=31 // pred_fallthru
          _
        %s205 = sand.u32 %s42, 1
        %s206 = scalar_lea.sflag [#allocation3], %s205
        %s207 = sand.u32 %s42, 1
        %s208 = smul.addr %s207, 8
        %s209 = scalar_lea.vmem [#allocation2], %s208
        %p210 = pneg %p55
        %p211 = pneg %p52
        %s212 = smul.u32 2, %s25
        %p213 = scmp.lt.s32.totalorder %s24, 1
        %s214 = scalar_select %p213, %s24, 1
        %p215 = scmp.lt.s32.totalorder %s212, 1
        %s216 = scalar_select %p215, %s212, 1
        %s217 = smul.addr %s214, 2
        %s218 = sadd.s32 %s216, %s217
        %s219 = scalar_lea.vmem %s1, %s218
        %p220 = pneg %p83
        %p221 = pneg %p80
        %p222 = pneg %p104
        %p223 = pneg %p101
        %p224 = pneg %p132
        %p225 = pneg %p129
        %s226 = sand.u32 %s119, 1
        %s227 = scalar_lea.sflag [#allocation4], %s226
        %s228 = sand.u32 %s119, 1
        %s229 = smul.addr %s228, 8
        %s230 = scalar_lea.vmem [#allocation5], %s229
        %s231 = smul.u32 2, %s25
        %s232 = smul.u32 2, %s25
        %p233 = scmp.lt.s32.totalorder %s24, 1
        %s234 = scalar_select %p233, %s24, 1
        %p235 = scmp.lt.s32.totalorder %s232, 1
        %s236 = scalar_select %p235, %s232, 1
        %s237 = smul.addr %s234, 2
        %s238 = sadd.s32 %s236, %s237
        %s239 = scalar_lea.vmem %s1, %s238
        %s240 = smul.u32 2, %s25
        %v241 = vld [vmem:[%s199] sm:$0xff]
        %v242 = vld [vmem:[%s239] sm:$0x3]
        %244 = vst [vmem:[#allocation1] ss:$2 sm:$0xff] %v241
        %v245 = vld.sshfl [vmem:[#allocation1] sm:$0xff pattern:$0x75316420]
        %v246 = vld.sshfl [vmem:[#allocation1 + $0x8] sm:$0xff pattern:$0x75316420]
        %vm249 = vcmask 1043456
        %v250 = vsel %vm249, %v245, -inf
        %v251 = vrot.slane %v250, 4
        %v252 = vmax.f32 %v250, %v251
        %v253 = vrot.slane %v252, 2
        %v254 = vmax.f32 %v252, %v253
        %v255 = vrot.slane %v254, 1
        %v256 = vmax.f32 %v254, %v255
        %v257 = vsel %vm249, %v246, -inf
        %v258 = vrot.slane %v257, 4
        %v259 = vmax.f32 %v257, %v258
        %v260 = vrot.slane %v259, 2
        %v261 = vmax.f32 %v259, %v260
        %v262 = vrot.slane %v261, 1
        %v263 = vmax.f32 %v261, %v262
        %v266 = vrot.slane %v263, 4
        %v267 = vsel %vm249, %v256, %v266
        %v269 = vsub.f32 %v241, %v267
        %v270 = vmul.f32 %v269, 1.442695
        %v271 = vpow.pop %v270
        %273 = vst [vmem:[#allocation1] ss:$2 sm:$0xff] %v271
        %v274 = vld.sshfl [vmem:[#allocation1] sm:$0xff pattern:$0x75316420]
        %v275 = vld.sshfl [vmem:[#allocation1 + $0x8] sm:$0xff pattern:$0x75316420]
        %v278 = vsel %vm249, %v274, 0.0
        %v279 = vrot.slane %v278, 4
        %v280 = vadd.f32 %v278, %v279
        %v281 = vrot.slane %v280, 2
        %v282 = vadd.f32 %v280, %v281
        %v283 = vrot.slane %v282, 1
        %v284 = vadd.f32 %v282, %v283
        %v285 = vsel %vm249, %v275, 0.0
        %v286 = vrot.slane %v285, 4
        %v287 = vadd.f32 %v285, %v286
        %v288 = vrot.slane %v287, 2
        %v289 = vadd.f32 %v287, %v288
        %v290 = vrot.slane %v289, 1
        %v291 = vadd.f32 %v289, %v290
        %v292 = vlaneseq
        %v293 = vshrl.u32 %v292, 7
        %v294 = vperm.slane %v242, 0
        %v295 = vperm.slane %v242, 1
        %vm296 = vcmp.eq.s32.totalorder %v293, %v294
        %vm297 = vcmp.eq.s32.totalorder %v293, %v295
        %v298 = vsel %vm296, 1, 0
        %v299 = vsel %vm297, 1, 0
        %v300 = vcvt.s32.f32 %v298
        %v301 = vcvt.s32.f32 %v299
        %v304 = vrot.slane %v301, 4
        %v305 = vsel %vm249, %v300, %v304
        %v307 = vmul.f32 %v269, %v305
        %309 = vst [vmem:[#allocation1] ss:$2 sm:$0xff] %v307
        %v310 = vld.sshfl [vmem:[#allocation1] sm:$0xff pattern:$0x75316420]
        %v311 = vld.sshfl [vmem:[#allocation1 + $0x8] sm:$0xff pattern:$0x75316420]
        %v314 = vsel %vm249, %v310, 0.0
        %v315 = vrot.slane %v314, 4
        %v316 = vadd.f32 %v314, %v315
        %v317 = vrot.slane %v316, 2
        %v318 = vadd.f32 %v316, %v317
        %v319 = vrot.slane %v318, 1
        %v320 = vadd.f32 %v318, %v319
        %v321 = vsel %vm249, %v311, 0.0
        %v322 = vrot.slane %v321, 4
        %v323 = vadd.f32 %v321, %v322
        %v324 = vrot.slane %v323, 2
        %v325 = vadd.f32 %v323, %v324
        %v326 = vrot.slane %v325, 1
        %v327 = vadd.f32 %v325, %v326
        %v328 = vlog2.pop %v284
        %v329 = vmul.f32 %v328, 0.6931472
        %v330 = vlog2.pop %v291
        %v331 = vmul.f32 %v330, 0.6931472
        %v332 = vsub.f32 %v320, %v329
        %v333 = vsub.f32 %v327, %v331
        %v334 = vmul.f32 %v271, %v305
        %336 = vst [vmem:[#allocation1] ss:$2 sm:$0xff] %v334
        %v337 = vld.sshfl [vmem:[#allocation1] sm:$0xff pattern:$0x75316420]
        %v338 = vld.sshfl [vmem:[#allocation1 + $0x8] sm:$0xff pattern:$0x75316420]
        %v341 = vsel %vm249, %v337, 0.0
        %v342 = vrot.slane %v341, 4
        %v343 = vadd.f32 %v341, %v342
        %v344 = vrot.slane %v343, 2
        %v345 = vadd.f32 %v343, %v344
        %v346 = vrot.slane %v345, 1
        %v347 = vadd.f32 %v345, %v346
        %v348 = vsel %vm249, %v338, 0.0
        %v349 = vrot.slane %v348, 4
        %v350 = vadd.f32 %v348, %v349
        %v351 = vrot.slane %v350, 2
        %v352 = vadd.f32 %v350, %v351
        %v353 = vrot.slane %v352, 1
        %v354 = vadd.f32 %v352, %v353
        %v355 = vrcp.pop %v284
        %v356 = vmul.f32 %v284, %v355
        %v357 = vsub.f32 1.0, %v356
        %v358 = vmul.f32 %v355, %v357
        %v359 = vadd.f32 %v355, %v358
        %vm360 = vweird.f32 %v284
        %vm361 = vweird.f32 %v355
        %vm362 = vmor %vm360, %vm361
        %v363 = vsel %vm362, %v355, %v359
        %v364 = vand.u32 2147483647, %v284
        %vm365 = vcmp.eq.f32.partialorder %v364, 8.507059e+37
        %v366 = vand.u32 %v284, 2147483648
        %v367 = vor.u32 1.1754944e-38, %v366
        %v368 = vsel %vm365, %v367, %v363
        %v369 = vmul.f32 %v347, %v368
        %v370 = vrcp.pop %v291
        %v371 = vmul.f32 %v291, %v370
        %v372 = vsub.f32 1.0, %v371
        %v373 = vmul.f32 %v370, %v372
        %v374 = vadd.f32 %v370, %v373
        %vm375 = vweird.f32 %v291
        %vm376 = vweird.f32 %v370
        %vm377 = vmor %vm375, %vm376
        %v378 = vsel %vm377, %v370, %v374
        %v379 = vand.u32 2147483647, %v291
        %vm380 = vcmp.eq.f32.partialorder %v379, 8.507059e+37
        %v381 = vand.u32 %v291, 2147483648
        %v382 = vor.u32 1.1754944e-38, %v381
        %v383 = vsel %vm380, %v382, %v378
        %v384 = vmul.f32 %v354, %v383
        %v385 = vld [vmem:[%s2] sm:$0xf]
        %387 = vset.pattern.permute.xlu0 0
        %388 = vperm.xlu0 %387, %v385
        %v389 = vpop.permute.xlu0 %388
        %v391 = vmul.f32 %v389, %v300
        %v392 = vmul.f32 %v389, %v301
        %v393 = vsel %vm249, %v391, 0.0
        %v394 = vrot.slane %v393, 4
        %v395 = vadd.f32 %v393, %v394
        %v396 = vrot.slane %v395, 2
        %v397 = vadd.f32 %v395, %v396
        %v398 = vrot.slane %v397, 1
        %v399 = vadd.f32 %v397, %v398
        %v400 = vsel %vm249, %v392, 0.0
        %v401 = vrot.slane %v400, 4
        %v402 = vadd.f32 %v400, %v401
        %v403 = vrot.slane %v402, 2
        %v404 = vadd.f32 %v402, %v403
        %v405 = vrot.slane %v404, 1
        %v406 = vadd.f32 %v404, %v405
        %v407 = vmul.f32 %v332, %v399
        %v408 = vmul.f32 %v333, %v406
        %v409 = vsub.f32 1.0, %v369
        %v410 = vsub.f32 1.0, %v384
        %v411 = vmul.f32 %v409, %v409
        %v412 = vmul.f32 %v410, %v410
        %v413 = vsub.f32 0.0, %v411
        %v414 = vsub.f32 0.0, %v412
        %v415 = vmul.f32 %v413, %v407
        %v416 = vmul.f32 %v414, %v408
        %vm417 = vcmask 1040384
        %v418 = vsel %vm417, %v415, 0.0
        %v419 = vsel %vm417, %v416, 0.0
        %v420 = vadd.f32 %v418, %v419
        %421 = vadd.xlane.f32.xlu0 %v420
        %v422 = vpop.xlane.xlu0 %421
        %v423 = vrot.slane %v422, 4
        %v424 = vadd.f32 %v422, %v423
        %v425 = vrot.slane %v424, 2
        %v426 = vadd.f32 %v424, %v425
        %v427 = vrot.slane %v426, 1
        %v428 = vadd.f32 %v426, %v427
        %s429 = vtos %v428
        %v430 = vlaneseq
        %v431 = vand.u32 %v430, 127
        %vm432 = vcmp.eq.s32.totalorder %v293, 0
        %vm433 = vcmp.eq.s32.totalorder %v431, 0
        %vm434 = vmand %vm432, %vm433
        %v435 = vstv %s429
        %v436 = vsel %vm434, %v435, 0.0
        %437 = vst [vmem:[%s230] sm:$0xff] %v436
        %s438 = sand.u32 %s119, 1
        %s439 = scalar_lea.sflag [#allocation4], %s438
        %s440 = sand.u32 %s119, 1
        %s441 = smul.addr %s440, 8
        %s442 = scalar_lea.vmem [#allocation5], %s441
        // Predicated region
        $region37: #{tpu_custom_call.1} parent=31 // pred_check
          %p443 = pneg %p129
        $region38: #{tpu_custom_call.1} parent=31 // pred_check_branch
          %445 = sbr.rel (%p443) target = $region40
        $region39: #{tpu_custom_call.1} parent=31 // pred_region
          %447 = vsyncadd %s439, 0
          %s448 = sadd.s32 %s25, %s24
          %s449 = smul.addr %s448, 8
          %s450 = scalar_lea.hbm %s3, %s449
          %s452 = sshll.u32 %s442, 4
          %s453 = int_to_ptr.vmem [resolvable:$true] %s452
          %s454 = sshll.u32 %s450, 4
          %s455 = int_to_ptr.hbm [resolvable:$true] %s454
          %457 = dma.vmem_to_hbm [thread:$0]  %s453, 128, %s455, %s439
        $region40: #{tpu_custom_call.1} parent=31 // pred_fallthru
          _
      $region32: #{tpu_custom_call.1} parent=5 // pred_fallthru
        _
      %p458 = scmp.le.s32.totalorder 2, %s15
      // Predicated region
      $region41: #{tpu_custom_call.1} parent=5 // pred_check
        %p459 = pneg %p458
      $region42: #{tpu_custom_call.1} parent=5 // pred_check_branch
        %461 = sbr.rel (%p459) target = $region44
      $region43: #{tpu_custom_call.1} parent=5 // pred_region
        %s462 = ssub.s32 %s15, 2
        // Predicated region
        $region45: #{tpu_custom_call.1} parent=43 // pred_check
          %p463 = pneg %p135
        $region46: #{tpu_custom_call.1} parent=43 // pred_check_branch
          %465 = sbr.rel (%p463) target = $region48
        $region47: #{tpu_custom_call.1} parent=43 // pred_region
          %s466 = sand.u32 %s120, 1
          %s467 = scalar_lea.sflag [#allocation4], %s466
          %s468 = sand.u32 %s120, 1
          %s469 = smul.addr %s468, 8
          %s470 = scalar_lea.vmem [#allocation5], %s469
          %472 = dma.done %s467, 128
        $region48: #{tpu_custom_call.1} parent=43 // pred_fallthru
          _
      $region44: #{tpu_custom_call.1} parent=5 // pred_fallthru
        _
    $region6: #{tpu_custom_call.1} parent=1 // loop_footer
      %s19 = sadd.s32 1, %s15
    $region7: #{tpu_custom_call.1} parent=1 // loop_footer_branch
      %14 = sbr.rel target = $region3
    $region8: #{tpu_custom_call.1} parent=1 // loop_exit
      _
    %473 = vsyncpa [#allocation3], 1
    %s474 = scalar_lea.sflag [#allocation3], 1
    %475 = vsyncpa %s474, 1
    %476 = vsyncpa [#allocation4], 1
    %s477 = scalar_lea.sflag [#allocation4], 1
    %478 = vsyncpa %s477, 1

</llo_original>
